<compile_context>
chip_gen: v7x
topology: tpu7x:2x2x1
jax: 0.10.0
libtpu: 0.0.40
codegen_flags: <defaults>
</compile_context>

<pallas_src>
import functools

import jax
import jax.numpy as jnp
from jax import lax
from jax.experimental import pallas as pl
from jax.experimental.pallas import tpu as pltpu


def _round_up(x: int, m: int) -> int:
    return ((x + m - 1) // m) * m


def _cdiv(a: int, b: int) -> int:
    return -(-a // b)


def _tpu_config():
    """Per-generation tiling / VMEM budget.  Conservative fallback if unknown."""
    kind = ""
    try:
        kind = jax.devices()[0].device_kind.lower()
    except Exception:  # pragma: no cover - no devices during tracing-only use
        pass
    is_tpu = "tpu" in kind
    is_v7 = is_tpu and "7" in kind
    if is_v7 or not is_tpu:
        # v7x: 64 MiB physical VMEM per TC -> leave headroom for Mosaic scratch.
        return dict(vmem_budget=48 * 1024 * 1024, tm_max=256, tn_target=512,
                    weight_bufs=2)
    # v5e / v6e (and other 128-MiB-VMEM parts): larger tiles cut weight re-streaming.
    return dict(vmem_budget=100 * 1024 * 1024, tm_max=512, tn_target=1024,
                weight_bufs=3)


def _vmem_bytes(tm, tn, in_f, x_dt, w1_dt, b1_dt, w2_dt, b2_dt, out_dt, wbufs):
    """Estimated VMEM usage with per-array itemsizes."""
    def b(dt):
        return jnp.dtype(dt).itemsize
    return (2 * tm * in_f * b(x_dt)             # x tile (double-buffered)
            + wbufs * in_f * tn * b(w1_dt)      # W1 column chunk
            + 2 * tn * b(b1_dt)                 # b1 chunk
            + wbufs * tn * in_f * b(w2_dt)      # W2 row chunk
            + 2 * in_f * b(b2_dt)               # b2
            + 2 * tm * in_f * b(out_dt)         # output tile
            + tm * in_f * 4                     # f32 accumulator scratch
            + 2 * tm * tn * 4)                  # f32 h / g intermediates


def _weight_spec(shape, index_map, bufs):
    """BlockSpec for a streamed weight chunk; deeper buffering when available."""
    if bufs > 2 and hasattr(pl, "Buffered"):
        try:
            return pl.BlockSpec(shape, index_map, pipeline_mode=pl.Buffered(bufs))
        except TypeError:
            pass  # pipeline_mode unsupported in this JAX version -> default 2-deep
    return pl.BlockSpec(shape, index_map)


def mlp_kernel(x_ref, w1_ref, b1_ref, w2_ref, b2_ref, o_ref, acc_ref,
               *, use_tanh_gelu: bool = False):
    # Grid: (row tiles [parallel], mlp_dim chunks [arbitrary/reduction]).
    n = pl.program_id(1)

    @pl.when(n == 0)
    def _init():
        acc_ref[...] = jnp.zeros_like(acc_ref)

    # dense1 for this mlp_dim chunk; operands stay in native dtype (fast MXU path),
    # accumulation in f32.
    h = jnp.dot(x_ref[...], w1_ref[...], preferred_element_type=jnp.float32)
    h = h + b1_ref[...].astype(jnp.float32)

    if use_tanh_gelu:
        # tanh approximation -> EUP (separate VLIW slot, nearly free); small
        # numerical deviation from torch.nn.GELU()'s exact erf.
        g = jax.nn.gelu(h, approximate=True)
    else:
        # Exact erf-GELU (matches torch.nn.GELU() default).
        g = 0.5 * h * (1.0 + lax.erf(h * jnp.float32(0.7071067811865476)))

    # dense2 partial for this chunk, accumulated in the f32 VMEM scratch.
    acc_ref[...] += jnp.dot(g.astype(w2_ref.dtype), w2_ref[...],
                            preferred_element_type=jnp.float32)

    @pl.when(n == pl.num_programs(1) - 1)
    def _finalize():
        o_ref[...] = (acc_ref[...]
                      + b2_ref[...].astype(jnp.float32)).astype(o_ref.dtype)


def prepare_mlp_params(w1, b1, w2, b2, *, tn=None):
    """One-time parameter prep: pad mlp_dim to a multiple of the chosen tn chunk.

    Call this once at parameter-init time; the per-call wrapper never re-pads the
    weights.  in_features is intentionally left unpadded.
    """
    in_features, mlp_dim = w1.shape
    assert w2.shape == (mlp_dim, in_features)
    cfg = _tpu_config()

    if tn is None:
        tn = min(cfg["tn_target"], max(128, _round_up(mlp_dim, 128)))
        # Shrink the mlp_dim chunk (multiples of 128) until a max-row tile fits the
        # VMEM budget; per-call the row tile can shrink further if needed.
        while tn > 128 and _vmem_bytes(cfg["tm_max"], tn, in_features,
                                       jnp.float32, w1.dtype, b1.dtype, w2.dtype,
                                       b2.dtype, jnp.float32,
                                       cfg["weight_bufs"]) > 0.9 * cfg["vmem_budget"]:
            tn = max(128, ((tn // 2) // 128) * 128)
    assert tn % 128 == 0

    mlp_p = _round_up(mlp_dim, tn)
    if mlp_p == mlp_dim:
        w1p, w2p = w1, w2
        b1p = b1.reshape(1, mlp_p)
    else:
        w1p = jnp.zeros((in_features, mlp_p), w1.dtype).at[:, :mlp_dim].set(w1)
        w2p = jnp.zeros((mlp_p, in_features), w2.dtype).at[:mlp_dim, :].set(w2)
        b1p = jnp.zeros((1, mlp_p), b1.dtype).at[0, :mlp_dim].set(b1.reshape(-1))
    b2p = b2.reshape(1, in_features)

    return dict(w1=w1p, b1=b1p, w2=w2p, b2=b2p,
                in_features=in_features, mlp_dim=mlp_dim, mlp_p=mlp_p, tn=tn)


def autoregressive_mlp_block(x, params, *, use_tanh_gelu=False, interpret=False):
    """y = gelu(x @ W1 + b1) @ W2 + b2 on [M, in_features] rows.

    `params` must come from prepare_mlp_params (weights pre-padded once).
    """
    M, in_f = x.shape
    assert in_f == params["in_features"]
    w1p, b1p, w2p, b2p = params["w1"], params["b1"], params["w2"], params["b2"]
    tn, mlp_p, mlp_dim = params["tn"], params["mlp_p"], params["mlp_dim"]
    out_dtype = x.dtype
    cfg = _tpu_config()

    n_chunks = mlp_p // tn
    # Deep weight buffering only pays off on a long inner (reduction) loop.
    wbufs = cfg["weight_bufs"] if n_chunks >= 4 else 2

    # Row tile: shrink until the per-dtype VMEM estimate fits the budget, then split
    # M into equal tiles with minimal padding.
    tm_cap = cfg["tm_max"]
    while tm_cap > 8 and _vmem_bytes(tm_cap, tn, in_f, x.dtype, w1p.dtype,
                                     b1p.dtype, w2p.dtype, b2p.dtype, out_dtype,
                                     wbufs) > 0.9 * cfg["vmem_budget"]:
        tm_cap = max(8, tm_cap // 2)
    n_row = max(1, _cdiv(M, tm_cap))
    tm = _round_up(_cdiv(M, n_row), 8)
    m_p = n_row * tm

    # Only the (small) activation is padded per call; padding is zeros -> exact.
    xp = x if m_p == M else jnp.zeros((m_p, in_f), x.dtype).at[:M, :].set(x)

    grid = (n_row, n_chunks)

    in_specs = [
        pl.BlockSpec((tm, in_f), lambda i, n: (i, 0)),        # x row tile (resident)
        _weight_spec((in_f, tn), lambda i, n: (0, n), wbufs),  # W1 column chunk
        pl.BlockSpec((1, tn), lambda i, n: (0, n)),            # b1 chunk
        _weight_spec((tn, in_f), lambda i, n: (n, 0), wbufs),  # W2 row chunk
        pl.BlockSpec((1, in_f), lambda i, n: (0, 0)),          # b2 (resident)
    ]

    # Advisory cost estimate for XLA scheduling around the kernel.
    itemsize = lambda a: jnp.dtype(a.dtype).itemsize
    cost = pl.CostEstimate(
        flops=int(4 * M * mlp_dim * in_f),
        transcendentals=int(M * mlp_dim),
        bytes_accessed=int(M * in_f * (itemsize(x) + jnp.dtype(out_dtype).itemsize)
                           + n_row * (w1p.size * itemsize(w1p)
                                      + w2p.size * itemsize(w2p))
                           + b1p.size * itemsize(b1p) + b2p.size * itemsize(b2p)),
    )

    yp = pl.pallas_call(
        functools.partial(mlp_kernel, use_tanh_gelu=use_tanh_gelu),
        out_shape=jax.ShapeDtypeStruct((m_p, in_f), out_dtype),
        grid_spec=pltpu.PrefetchScalarGridSpec(
            num_scalar_prefetch=0,
            grid=grid,
            in_specs=in_specs,
            out_specs=pl.BlockSpec((tm, in_f), lambda i, n: (i, 0)),
            scratch_shapes=[pltpu.VMEM((tm, in_f), jnp.float32)],
        ),
        compiler_params=pltpu.CompilerParams(
            dimension_semantics=("parallel", "arbitrary"),
            vmem_limit_bytes=int(cfg["vmem_budget"]),
        ),
        cost_estimate=cost,
        interpret=interpret,
    )(xp, w1p, b1p, w2p, b2p)

    return yp if m_p == M else yp[:M, :]


def reference_mlp(x, w1, b1, w2, b2):
    h = x.astype(jnp.float32) @ w1.astype(jnp.float32) + b1.astype(jnp.float32)
    g = 0.5 * h * (1.0 + lax.erf(h * jnp.float32(0.7071067811865476)))
    y = g @ w2.astype(jnp.float32) + b2.astype(jnp.float32)
    return y.astype(x.dtype)


if __name__ == "__main__":
    # Small shapes consistent with the module's forward:
    # x: (batch=2, seq=8, in_features=32), mlp_dim=128.
    batch, seq, in_features, mlp_dim = 2, 8, 32, 128

    key = jax.random.PRNGKey(0)
    kx, kw1, kb1, kw2, kb2 = jax.random.split(key, 5)

    x = jax.random.normal(kx, (batch, seq, in_features), dtype=jnp.float32)

    # Deterministic parameter init (uniform like nn.Linear's default range).
    bound1 = 1.0 / jnp.sqrt(in_features)
    bound2 = 1.0 / jnp.sqrt(mlp_dim)
    w1 = jax.random.uniform(kw1, (in_features, mlp_dim), jnp.float32, -bound1, bound1)
    b1 = jax.random.uniform(kb1, (mlp_dim,), jnp.float32, -bound1, bound1)
    w2 = jax.random.uniform(kw2, (mlp_dim, in_features), jnp.float32, -bound2, bound2)
    b2 = jax.random.uniform(kb2, (in_features,), jnp.float32, -bound2, bound2)

    # One-time parameter prep (padding happens here, NOT per forward call).
    params = prepare_mlp_params(w1, b1, w2, b2)
    jax.block_until_ready(params["w1"])

    # Flatten (batch, seq) -> M rows for the kernel, then restore the shape.
    x2d = x.reshape(batch * seq, in_features)
    y2d = autoregressive_mlp_block(x2d, params)
    y = y2d.reshape(batch, seq, in_features)
    jax.block_until_ready(y)

    # Correctness check against a pure-JAX reference (exact erf-GELU).
    y_ref = reference_mlp(x2d, w1, b1, w2, b2).reshape(batch, seq, in_features)
    assert jnp.allclose(y, y_ref, atol=1e-5, rtol=1e-5), "mismatch vs reference"

    print("KERNEL_OK")
</pallas_src>

<mosaic_0001>
module attributes {stable_mosaic.version = 11 : i64} {
  func.func @mlp_kernel(%arg0: i32, %arg1: i32, %arg2: memref<16x32xf32, #tpu.memory_space<vmem>>, %arg3: memref<32x128xf32, #tpu.memory_space<vmem>>, %arg4: memref<1x128xf32, #tpu.memory_space<vmem>>, %arg5: memref<128x32xf32, #tpu.memory_space<vmem>>, %arg6: memref<1x32xf32, #tpu.memory_space<vmem>>, %arg7: memref<16x32xf32, #tpu.memory_space<vmem>>, %arg8: memref<16x32xf32, #tpu.memory_space<vmem>>) attributes {dimension_semantics = [#tpu.dimension_semantics<parallel>, #tpu.dimension_semantics<arbitrary>], iteration_bounds = array<i64: 1, 1>, scalar_prefetch = 0 : i64, scratch_operands = 1 : i64, tpu.core_type = #tpu.core_type<tc>, window_params = [{transform_indices = @transform_0, window_bounds = array<i64: 16, 32>}, {transform_indices = @transform_1, window_bounds = array<i64: 32, 128>}, {transform_indices = @transform_2, window_bounds = array<i64: 1, 128>}, {transform_indices = @transform_3, window_bounds = array<i64: 128, 32>}, {pipeline_mode = #tpu.pipeline_mode<synchronous>, transform_indices = @transform_4, window_bounds = array<i64: 1, 32>}, {transform_indices = @transform_5, window_bounds = array<i64: 16, 32>}]} {
    %c0_i32 = arith.constant 0 : i32
    %0 = arith.cmpi eq, %arg1, %c0_i32 : i32
    %1 = arith.extui %0 : i1 to i32
    %c0_i32_0 = arith.constant 0 : i32
    %2 = arith.cmpi ne, %1, %c0_i32_0 : i32
    scf.if %2 {
      %cst_18 = arith.constant 0.000000e+00 : f32
      %25 = vector.broadcast %cst_18 : f32 to vector<16x32xf32>
      %c0_19 = arith.constant 0 : index
      %c0_20 = arith.constant 0 : index
      %26 = vector.load %arg8[%c0_19, %c0_20] : memref<16x32xf32, #tpu.memory_space<vmem>>, vector<16x32xf32>
      tpu.vector_store %arg8[%c0_19, %c0_20], %25 {strides = array<i32>} : memref<16x32xf32, #tpu.memory_space<vmem>>, vector<16x32xf32>,
    } else {
    }
    %c0 = arith.constant 0 : index
    %c0_1 = arith.constant 0 : index
    %3 = vector.load %arg2[%c0, %c0_1] : memref<16x32xf32, #tpu.memory_space<vmem>>, vector<16x32xf32>
    %c0_2 = arith.constant 0 : index
    %c0_3 = arith.constant 0 : index
    %4 = vector.load %arg3[%c0_2, %c0_3] : memref<32x128xf32, #tpu.memory_space<vmem>>, vector<32x128xf32>
    %cst = arith.constant dense<0.000000e+00> : vector<16x128xf32>
    %5 = tpu.matmul %3, %4, %cst {dimension_numbers = #tpu.dot_dimension_numbers<[1], [0], [0], [1], [0, 0, 1, 1], [], []>} : vector<16x32xf32>, vector<32x128xf32>, vector<16x128xf32> -> vector<16x128xf32>
    %c0_4 = arith.constant 0 : index
    %c0_5 = arith.constant 0 : index
    %6 = vector.load %arg4[%c0_4, %c0_5] : memref<1x128xf32, #tpu.memory_space<vmem>>, vector<1x128xf32>
    %7 = vector.broadcast %6 : vector<1x128xf32> to vector<16x128xf32>
    %8 = arith.addf %5, %7 : vector<16x128xf32>
    %cst_6 = arith.constant 5.000000e-01 : f32
    %9 = vector.broadcast %cst_6 : f32 to vector<16x128xf32>
    %10 = arith.mulf %9, %8 : vector<16x128xf32>
    %cst_7 = arith.constant 0.707106769 : f32
    %11 = vector.broadcast %cst_7 : f32 to vector<16x128xf32>
    %12 = arith.mulf %8, %11 : vector<16x128xf32>
    %13 = math.erf %12 : vector<16x128xf32>
    %cst_8 = arith.constant 1.000000e+00 : f32
    %14 = vector.broadcast %cst_8 : f32 to vector<16x128xf32>
    %15 = arith.addf %14, %13 : vector<16x128xf32>
    %16 = arith.mulf %10, %15 : vector<16x128xf32>
    %c0_9 = arith.constant 0 : index
    %c0_10 = arith.constant 0 : index
    %17 = vector.load %arg8[%c0_9, %c0_10] : memref<16x32xf32, #tpu.memory_space<vmem>>, vector<16x32xf32>
    %c0_11 = arith.constant 0 : index
    %c0_12 = arith.constant 0 : index
    %18 = vector.load %arg5[%c0_11, %c0_12] : memref<128x32xf32, #tpu.memory_space<vmem>>, vector<128x32xf32>
    %cst_13 = arith.constant dense<0.000000e+00> : vector<16x32xf32>
    %19 = tpu.matmul %16, %18, %cst_13 {dimension_numbers = #tpu.dot_dimension_numbers<[1], [0], [0], [1], [0, 0, 1, 1], [], []>} : vector<16x128xf32>, vector<128x32xf32>, vector<16x32xf32> -> vector<16x32xf32>
    %20 = arith.addf %17, %19 : vector<16x32xf32>
    %c0_14 = arith.constant 0 : index
    %c0_15 = arith.constant 0 : index
    %21 = vector.load %arg8[%c0_14, %c0_15] : memref<16x32xf32, #tpu.memory_space<vmem>>, vector<16x32xf32>
    tpu.vector_store %arg8[%c0_14, %c0_15], %20 {strides = array<i32>} : memref<16x32xf32, #tpu.memory_space<vmem>>, vector<16x32xf32>,
    %c0_i32_16 = arith.constant 0 : i32
    %22 = arith.cmpi eq, %arg1, %c0_i32_16 : i32
    %23 = arith.extui %22 : i1 to i32
    %c0_i32_17 = arith.constant 0 : i32
    %24 = arith.cmpi ne, %23, %c0_i32_17 : i32
    scf.if %24 {
      %c0_18 = arith.constant 0 : index
      %c0_19 = arith.constant 0 : index
      %25 = vector.load %arg8[%c0_18, %c0_19] : memref<16x32xf32, #tpu.memory_space<vmem>>, vector<16x32xf32>
      %c0_20 = arith.constant 0 : index
      %c0_21 = arith.constant 0 : index
      %26 = vector.load %arg6[%c0_20, %c0_21] : memref<1x32xf32, #tpu.memory_space<vmem>>, vector<1x32xf32>
      %27 = vector.broadcast %26 : vector<1x32xf32> to vector<16x32xf32>
      %28 = arith.addf %25, %27 : vector<16x32xf32>
      %c0_22 = arith.constant 0 : index
      %c0_23 = arith.constant 0 : index
      %29 = vector.load %arg7[%c0_22, %c0_23] : memref<16x32xf32, #tpu.memory_space<vmem>>, vector<16x32xf32>
      tpu.vector_store %arg7[%c0_22, %c0_23], %28 {strides = array<i32>} : memref<16x32xf32, #tpu.memory_space<vmem>>, vector<16x32xf32>,
    } else {
    }
    return
  }
  func.func @transform_0(%arg0: i32, %arg1: i32) -> (i32, i32) {
    %c0_i32 = arith.constant 0 : i32
    %c0_i32_0 = arith.constant 0 : i32
    return %arg0, %c0_i32 : i32, i32
  }
  func.func @transform_1(%arg0: i32, %arg1: i32) -> (i32, i32) {
    %c0_i32 = arith.constant 0 : i32
    %c0_i32_0 = arith.constant 0 : i32
    return %c0_i32, %arg1 : i32, i32
  }
  func.func @transform_2(%arg0: i32, %arg1: i32) -> (i32, i32) {
    %c0_i32 = arith.constant 0 : i32
    %c0_i32_0 = arith.constant 0 : i32
    return %c0_i32, %arg1 : i32, i32
  }
  func.func @transform_3(%arg0: i32, %arg1: i32) -> (i32, i32) {
    %c0_i32 = arith.constant 0 : i32
    %c0_i32_0 = arith.constant 0 : i32
    return %arg1, %c0_i32 : i32, i32
  }
  func.func @transform_4(%arg0: i32, %arg1: i32) -> (i32, i32) {
    %c0_i32 = arith.constant 0 : i32
    %c0_i32_0 = arith.constant 0 : i32
    %c0_i32_1 = arith.constant 0 : i32
    return %c0_i32, %c0_i32_0 : i32, i32
  }
  func.func @transform_5(%arg0: i32, %arg1: i32) -> (i32, i32) {
    %c0_i32 = arith.constant 0 : i32
    %c0_i32_0 = arith.constant 0 : i32
    return %arg0, %c0_i32 : i32, i32
  }
}

</mosaic_0001>

<llo_original>
// kernel: tpu_custom_call.1
$region0: #{tpu_custom_call.1}
  #allocation0 [shape = 'u32[]', space=smem, size = 0x4, offset = 0x4, fixed_abs, tag = 'smem constant byte address 0x4 - core index']
  #allocation1 [shape = 'u32[144,128]{1,0:T(1,128)}', space=vmem, size = 0x12000, scoped, tag = 'internal scratch']
  #allocation2 [shape = 'f32[16,32]{1,0:T(8,128)}', space=vmem, size = 0x2000, scoped, tag = 'scratch operand']
  %s0 = inlined_call_operand.vmem [shape: f32[16,32], index: 0, kind: input, shape index: {}]
  %s1 = inlined_call_operand.vmem [shape: f32[32,128], index: 1, kind: input, shape index: {}]
  %s2 = inlined_call_operand.vmem [shape: f32[1,128], index: 2, kind: input, shape index: {}]
  %s3 = inlined_call_operand.vmem [shape: f32[128,32], index: 3, kind: input, shape index: {}]
  %s4 = inlined_call_operand.vmem [shape: f32[1,32], index: 4, kind: input, shape index: {}]
  %s5 = inlined_call_operand.hbm [shape: f32[16,32], index: 5, kind: output, shape index: {}]
  %s6 = sld [smem:[#allocation0]]
  $region38: #{tpu_custom_call.1} parent=0
    _
  %s8 = ssub.s32 1, %s6
  %s9 = scalar_select 0, %s8, %s6
  $region1: #{tpu_custom_call.1} parent=0
    #allocation3 [shape = 'u8[8192]{0}', space=vmem, size = 0x2000, scoped, tag = 'output window, operand 0, single buffered']
    #allocation4 [shape = 's32[1]{0}', space=sflag, size = 0x4, scoped, tag = 'scoped memory for tpu_custom_call.1']
    %10 = vsyncpa [#allocation4], 0
    // Predicated region
    $region2: #{tpu_custom_call.1} parent=1 // pred_check
      _
    $region3: #{tpu_custom_call.1} parent=1 // pred_check_branch
      %12 = sbr.rel (0) target = $region5
    $region4: #{tpu_custom_call.1} parent=1 // pred_region
      _
    $region5: #{tpu_custom_call.1} parent=1 // pred_fallthru
      _
    // Predicated region
    $region6: #{tpu_custom_call.1} parent=1 // pred_check
      _
    $region7: #{tpu_custom_call.1} parent=1 // pred_check_branch
      %14 = sbr.rel (0) target = $region9
    $region8: #{tpu_custom_call.1} parent=1 // pred_region
      _
    $region9: #{tpu_custom_call.1} parent=1 // pred_fallthru
      _
    // Predicated region
    $region10: #{tpu_custom_call.1} parent=1 // pred_check
      _
    $region11: #{tpu_custom_call.1} parent=1 // pred_check_branch
      %16 = sbr.rel (0) target = $region13
    $region12: #{tpu_custom_call.1} parent=1 // pred_region
      _
    $region13: #{tpu_custom_call.1} parent=1 // pred_fallthru
      _
    // Predicated region
    $region14: #{tpu_custom_call.1} parent=1 // pred_check
      _
    $region15: #{tpu_custom_call.1} parent=1 // pred_check_branch
      %18 = sbr.rel (0) target = $region17
    $region16: #{tpu_custom_call.1} parent=1 // pred_region
      _
    $region17: #{tpu_custom_call.1} parent=1 // pred_fallthru
      _
    // Predicated region
    $region18: #{tpu_custom_call.1} parent=1 // pred_check
      _
    $region19: #{tpu_custom_call.1} parent=1 // pred_check_branch
      %20 = sbr.rel (0) target = $region21
    $region20: #{tpu_custom_call.1} parent=1 // pred_region
      _
    $region21: #{tpu_custom_call.1} parent=1 // pred_fallthru
      _
    %p21 = scmp.eq.s32.totalorder 0, 0
    // Predicated region
    $region22: #{tpu_custom_call.1} parent=1 // pred_check
      %p22 = pneg %p21
    $region23: #{tpu_custom_call.1} parent=1 // pred_check_branch
      %24 = sbr.rel (%p22) target = $region25
    $region24: #{tpu_custom_call.1} parent=1 // pred_region
      %vm25 = vcmask 261120
      %26 = vst.msk [vmem:[#allocation2] sm:$0xff] %vm25, 0.0
      %27 = vst.msk [vmem:[#allocation2 + $0x8] sm:$0xff] %vm25, 0.0
    $region25: #{tpu_custom_call.1} parent=1 // pred_fallthru
      _
    %v28 = vld [vmem:[%s0] sm:$0xff]
    %v29 = vld [vmem:[%s0 + $0x8] sm:$0xff]
    %v30 = vld [vmem:[%s1] sm:$0xff]
    %v31 = vld [vmem:[%s1 + $0x8] sm:$0xff]
    %v32 = vld [vmem:[%s1 + $0x10] sm:$0xff]
    %v33 = vld [vmem:[%s1 + $0x18] sm:$0xff]
    %v34 = vld [vmem:[%s2] sm:$0x1]
    %v36 = vlaneseq
    %v37 = vshrl.u32 %v36, 7
    %v38 = vsub.s32 0, %v37
    %v39 = vrot.slane %v34, %v38
    %vm41 = vcmask 261120
    %v43 = vsel %vm41, %v28, 0
    %v46 = vsel %vm41, %v29, 0
    %48 = vmatprep.subr.mxu0 0.0
    %49 = vmatpush1.msra.mxu0 %v30
    %50 = vmatprep.subr.mxu0 0.0
    %51 = vmatpush1.msra.mxu0 %v31
    %52 = vmatprep.subr.mxu0 0.0
    %53 = vmatpush1.msra.mxu0 %v32
    %54 = vmatprep.subr.mxu0 0.0
    %55 = vmatpush1.msra.mxu0 %v33
    %56 = vmatprep.subr.mxu0 0.0
    %57 = vmatpush1.msra.mxu0 0.0
    %58 = vmatprep.subr.mxu0 0.0
    %59 = vmatpush1.msra.mxu0 0.0
    %60 = vmatprep.subr.mxu0 0.0
    %61 = vmatpush1.msra.mxu0 0.0
    %62 = vmatprep.subr.mxu0 0.0
    %63 = vmatpush1.msra.mxu0 0.0
    %64 = vmatprep.subr.mxu0 0.0
    %65 = vmatpush1.msra.mxu0 0.0
    %66 = vmatprep.subr.mxu0 0.0
    %67 = vmatpush1.msra.mxu0 0.0
    %68 = vmatprep.subr.mxu0 0.0
    %69 = vmatpush1.msra.mxu0 0.0
    %70 = vmatprep.subr.mxu0 0.0
    %71 = vmatpush1.msra.mxu0 0.0
    %72 = vmatprep.subr.mxu0 0.0
    %73 = vmatpush1.msra.mxu0 0.0
    %74 = vmatprep.subr.mxu0 0.0
    %75 = vmatpush1.msra.mxu0 0.0
    %76 = vmatprep.subr.mxu0 0.0
    %77 = vmatpush1.msra.mxu0 0.0
    %78 = vmatprep.subr.mxu0 0.0
    %79 = vmatpush1.msra.mxu0 0.0
    %80 = vmatprep.subr.mxu0 0.0
    %81 = vmatpush1.msra.mxu0 0.0
    %82 = vmatprep.subr.mxu0 0.0
    %83 = vmatpush1.msra.mxu0 0.0
    %84 = vmatprep.subr.mxu0 0.0
    %85 = vmatpush1.msra.mxu0 0.0
    %86 = vmatprep.subr.mxu0 0.0
    %87 = vmatpush1.msra.mxu0 0.0
    %88 = vmatprep.subr.mxu0 0.0
    %89 = vmatpush1.msra.mxu0 0.0
    %90 = vmatprep.subr.mxu0 0.0
    %91 = vmatpush1.msra.mxu0 0.0
    %92 = vmatprep.subr.mxu0 0.0
    %93 = vmatpush1.msra.mxu0 0.0
    %94 = vmatprep.subr.mxu0 0.0
    %95 = vmatpush1.msra.mxu0 0.0
    %96 = vmatprep.subr.mxu0 0.0
    %97 = vmatpush1.msra.mxu0 0.0
    %98 = vmatprep.subr.mxu0 0.0
    %99 = vmatpush1.msra.mxu0 0.0
    %100 = vmatprep.subr.mxu0 0.0
    %101 = vmatpush1.msra.mxu0 0.0
    %102 = vmatprep.subr.mxu0 0.0
    %103 = vmatpush1.msra.mxu0 0.0
    %104 = vmatprep.subr.mxu0 0.0
    %105 = vmatpush1.msra.mxu0 0.0
    %106 = vmatprep.subr.mxu0 0.0
    %107 = vmatpush1.msra.mxu0 0.0
    %108 = vmatprep.subr.mxu0 0.0
    %109 = vmatpush1.msra.mxu0 0.0
    %110 = vmatprep.subr.mxu0 0.0
    %111 = vmatpush1.msra.mxu0 0.0
    %112 = vmatprep.mubr.f32.mxu0 0.0
    %113 = vmatmul.mubr.f32.gmra.mrb[0].mxu0 %v43
    %v114 = vpop.f32.mrb[0].mxu0
    %v115 = vadd.f32 %v39, %v114
    %v116 = vpop.f32.mrb[0].mxu0
    %117 = vmatprep.mubr.f32.mxu0 0.0
    %118 = vmatmul.mubr.f32.gmra.mrb[0].mxu0 %v46
    %v119 = vpop.f32.mrb[0].mxu0
    %v120 = vadd.f32 %v39, %v119
    %v121 = vpop.f32.mrb[0].mxu0
    %122 = vdwg.mxu0
    %v123 = vmul.f32 %v115, 0.5
    %v124 = vmul.f32 %v120, 0.5
    %v125 = vmul.f32 %v115, 0.70710677
    %v126 = vmul.f32 %v120, 0.70710677
    %v127 = verf.f32.pop %v125
    %v128 = verf.f32.pop %v126
    %v129 = vadd.f32 %v127, 1.0
    %v130 = vadd.f32 %v128, 1.0
    %v131 = vmul.f32 %v123, %v129
    %v132 = vmul.f32 %v124, %v130
    %v133 = vld [vmem:[#allocation2] sm:$0xff]
    %v134 = vld [vmem:[#allocation2 + $0x8] sm:$0xff]
    %v135 = vld [vmem:[%s3] sm:$0xff]
    %v136 = vld [vmem:[%s3 + $0x8] sm:$0xff]
    %v137 = vld [vmem:[%s3 + $0x10] sm:$0xff]
    %v138 = vld [vmem:[%s3 + $0x18] sm:$0xff]
    %v139 = vld [vmem:[%s3 + $0x20] sm:$0xff]
    %v140 = vld [vmem:[%s3 + $0x28] sm:$0xff]
    %v141 = vld [vmem:[%s3 + $0x30] sm:$0xff]
    %v142 = vld [vmem:[%s3 + $0x38] sm:$0xff]
    %v143 = vld [vmem:[%s3 + $0x40] sm:$0xff]
    %v144 = vld [vmem:[%s3 + $0x48] sm:$0xff]
    %v145 = vld [vmem:[%s3 + $0x50] sm:$0xff]
    %v146 = vld [vmem:[%s3 + $0x58] sm:$0xff]
    %v147 = vld [vmem:[%s3 + $0x60] sm:$0xff]
    %v148 = vld [vmem:[%s3 + $0x68] sm:$0xff]
    %v149 = vld [vmem:[%s3 + $0x70] sm:$0xff]
    %v150 = vld [vmem:[%s3 + $0x78] sm:$0xff]
    %151 = vmatprep.subr.mxu0 0.0
    %152 = vmatpush1.msra.mxu0 %v135
    %153 = vmatprep.subr.mxu0 0.0
    %154 = vmatpush1.msra.mxu0 %v136
    %155 = vmatprep.subr.mxu0 0.0
    %156 = vmatpush1.msra.mxu0 %v137
    %157 = vmatprep.subr.mxu0 0.0
    %158 = vmatpush1.msra.mxu0 %v138
    %159 = vmatprep.subr.mxu0 0.0
    %160 = vmatpush1.msra.mxu0 %v139
    %161 = vmatprep.subr.mxu0 0.0
    %162 = vmatpush1.msra.mxu0 %v140
    %163 = vmatprep.subr.mxu0 0.0
    %164 = vmatpush1.msra.mxu0 %v141
    %165 = vmatprep.subr.mxu0 0.0
    %166 = vmatpush1.msra.mxu0 %v142
    %167 = vmatprep.subr.mxu0 0.0
    %168 = vmatpush1.msra.mxu0 %v143
    %169 = vmatprep.subr.mxu0 0.0
    %170 = vmatpush1.msra.mxu0 %v144
    %171 = vmatprep.subr.mxu0 0.0
    %172 = vmatpush1.msra.mxu0 %v145
    %173 = vmatprep.subr.mxu0 0.0
    %174 = vmatpush1.msra.mxu0 %v146
    %175 = vmatprep.subr.mxu0 0.0
    %176 = vmatpush1.msra.mxu0 %v147
    %177 = vmatprep.subr.mxu0 0.0
    %178 = vmatpush1.msra.mxu0 %v148
    %179 = vmatprep.subr.mxu0 0.0
    %180 = vmatpush1.msra.mxu0 %v149
    %181 = vmatprep.subr.mxu0 0.0
    %182 = vmatpush1.msra.mxu0 %v150
    %183 = vmatprep.subr.mxu0 0.0
    %184 = vmatpush1.msra.mxu0 0.0
    %185 = vmatprep.subr.mxu0 0.0
    %186 = vmatpush1.msra.mxu0 0.0
    %187 = vmatprep.subr.mxu0 0.0
    %188 = vmatpush1.msra.mxu0 0.0
    %189 = vmatprep.subr.mxu0 0.0
    %190 = vmatpush1.msra.mxu0 0.0
    %191 = vmatprep.subr.mxu0 0.0
    %192 = vmatpush1.msra.mxu0 0.0
    %193 = vmatprep.subr.mxu0 0.0
    %194 = vmatpush1.msra.mxu0 0.0
    %195 = vmatprep.subr.mxu0 0.0
    %196 = vmatpush1.msra.mxu0 0.0
    %197 = vmatprep.subr.mxu0 0.0
    %198 = vmatpush1.msra.mxu0 0.0
    %199 = vmatprep.subr.mxu0 0.0
    %200 = vmatpush1.msra.mxu0 0.0
    %201 = vmatprep.subr.mxu0 0.0
    %202 = vmatpush1.msra.mxu0 0.0
    %203 = vmatprep.subr.mxu0 0.0
    %204 = vmatpush1.msra.mxu0 0.0
    %205 = vmatprep.subr.mxu0 0.0
    %206 = vmatpush1.msra.mxu0 0.0
    %207 = vmatprep.subr.mxu0 0.0
    %208 = vmatpush1.msra.mxu0 0.0
    %209 = vmatprep.subr.mxu0 0.0
    %210 = vmatpush1.msra.mxu0 0.0
    %211 = vmatprep.subr.mxu0 0.0
    %212 = vmatpush1.msra.mxu0 0.0
    %213 = vmatprep.subr.mxu0 0.0
    %214 = vmatpush1.msra.mxu0 0.0
    %215 = vmatprep.mubr.f32.mxu0 0.0
    %216 = vmatmul.mubr.f32.gmra.mrb[0].mxu0 %v131
    %v217 = vpop.f32.mrb[0].mxu0
    %v218 = vadd.f32 0.0, %v217
    %v219 = vpop.f32.mrb[0].mxu0
    %220 = vmatprep.mubr.f32.mxu0 0.0
    %221 = vmatmul.mubr.f32.gmra.mrb[0].mxu0 %v132
    %v222 = vpop.f32.mrb[0].mxu0
    %v223 = vadd.f32 0.0, %v222
    %v224 = vpop.f32.mrb[0].mxu0
    %225 = vdwg.mxu0
    %v226 = vadd.f32 %v133, %v218
    %v227 = vadd.f32 %v134, %v223
    %228 = vst.msk [vmem:[#allocation2] sm:$0xff] %vm41, %v226
    %229 = vst.msk [vmem:[#allocation2 + $0x8] sm:$0xff] %vm41, %v227
    // Predicated region
    $region26: #{tpu_custom_call.1} parent=1 // pred_check
      %p230 = pneg %p21
    $region27: #{tpu_custom_call.1} parent=1 // pred_check_branch
      %232 = sbr.rel (%p230) target = $region29
    $region28: #{tpu_custom_call.1} parent=1 // pred_region
      %v233 = vld [vmem:[#allocation2] sm:$0xff]
      %v234 = vld [vmem:[#allocation2 + $0x8] sm:$0xff]
      %v235 = vld [vmem:[%s4] sm:$0x1]
      %v237 = vlaneseq
      %v238 = vshrl.u32 %v237, 7
      %v239 = vsub.s32 0, %v238
      %v240 = vrot.slane %v235, %v239
      %v242 = vadd.f32 %v233, %v240
      %v243 = vadd.f32 %v234, %v240
      %244 = vst.msk [vmem:[#allocation3] sm:$0xff] %vm41, %v242
      %245 = vst.msk [vmem:[#allocation3 + $0x8] sm:$0xff] %vm41, %v243
    $region29: #{tpu_custom_call.1} parent=1 // pred_fallthru
      _
    // Predicated region
    $region30: #{tpu_custom_call.1} parent=1 // pred_check
      _
    $region31: #{tpu_custom_call.1} parent=1 // pred_check_branch
      %247 = sbr.rel (0) target = $region33
    $region32: #{tpu_custom_call.1} parent=1 // pred_region
      %s249 = ssub.s32 256, 256
      %250 = vsyncadd [#allocation4], %s249
      %s251 = sshll.u32 [#allocation3], 4
      %s252 = int_to_ptr.vmem [resolvable:$true] %s251
      %257 = dma.vmem_to_hbm [thread:$0]  %s252, 256, %s5, [#allocation4], 128, 128, 8
    $region33: #{tpu_custom_call.1} parent=1 // pred_fallthru
      _
    // Predicated region
    $region34: #{tpu_custom_call.1} parent=1 // pred_check
      _
    $region35: #{tpu_custom_call.1} parent=1 // pred_check_branch
      %259 = sbr.rel (0) target = $region37
    $region36: #{tpu_custom_call.1} parent=1 // pred_region
      %260 = dma.done [#allocation4], 256
    $region37: #{tpu_custom_call.1} parent=1 // pred_fallthru
      _
    %261 = vsyncpa [#allocation4], 1

</llo_original>
